<compile_context>
chip_gen: v5e
topology: v5e:2x2
jax: 0.10.0
libtpu: 0.0.40
codegen_flags: <defaults>
</compile_context>

<pallas_src>
import jax
import jax.numpy as jnp
from jax.experimental import pallas as pl
from jax.experimental.pallas import tpu as pltpu


def attack_kernel(x_ref, w1t_ref, b1_ref, dw_ref, db_ref, o_ref):
    # ---- layer 1 on the MXU: (tile, F) @ (F, H) -> (tile, H), bf16 in / f32 acc ----
    x = x_ref[...].astype(jnp.bfloat16)                       # in-kernel cast (cheap VPU work)
    h = jnp.dot(x, w1t_ref[...], preferred_element_type=jnp.float32)
    h = jnp.maximum(h + b1_ref[...], 0.0)                     # bias + ReLU (f32, VPU)

    # ---- layer 2 + softmax over C=2, off the MXU ----
    # dw/db already contain 0.5*(w2[1]-w2[0]) and 0.5*(b2[1]-b2[0]), so
    # z == 0.5 * (logit1 - logit0) and sigmoid(logit diff) = 0.5*(1 + tanh(z)).
    z = jnp.sum(h * dw_ref[...], axis=-1, keepdims=True) + db_ref[0]   # (tile, 1)
    t = jnp.tanh(z)                                                     # single EUP op
    p1 = 0.5 + 0.5 * t                                                   # softmax[:, 1]
    p0 = 0.5 - 0.5 * t                                                   # softmax[:, 0] == 1 - p1

    # Row-major (tile, 2) output written directly — no external transpose needed.
    o_ref[:, 0:1] = p0.astype(o_ref.dtype)
    o_ref[:, 1:2] = p1.astype(o_ref.dtype)


def attack_model_forward(x, w1, b1, w2, b2, *, tile_b=8192):
    """AttackModel forward.

    x:  (B, F)   inputs (native dtype; cast to bf16 inside the kernel)
    w1: (H, F)   layer1 weight (PyTorch nn.Linear layout)
    b1: (H,)     layer1 bias
    w2: (C, H)   layer2 weight (C == 2)
    b2: (C,)     layer2 bias
    returns (B, C) float32 softmax probabilities.
    """
    B, F = x.shape
    H, F2 = w1.shape
    C, H2 = w2.shape
    assert F == F2 and H == H2 and C == 2
    assert tile_b % 8 == 0, "tile_b must be a multiple of 8 (sublane)"

    # Large batch tile to amortize per-grid-step overhead; cap at sublane-rounded B.
    tile = min(tile_b, ((B + 7) // 8) * 8)
    grid = (pl.cdiv(B, tile),)        # ragged tail block handled by Pallas masking

    # Tiny one-time parameter prep (a few KiB total): transposed/cast layer-1 weight,
    # layer-2 folded into a single 0.5*(logit-difference) row + scalar bias.
    w1t = w1.T.astype(jnp.bfloat16)                                   # (F, H)
    b1_row = b1.reshape(1, H).astype(jnp.float32)                     # (1, H)
    dw_row = (0.5 * (w2[1] - w2[0])).reshape(1, H).astype(jnp.float32)  # (1, H)
    db = (0.5 * (b2[1] - b2[0])).reshape(1).astype(jnp.float32)         # (1,) SMEM scalar

    out = pl.pallas_call(
        attack_kernel,
        out_shape=jax.ShapeDtypeStruct((B, C), jnp.float32),
        grid=grid,
        in_specs=[
            pl.BlockSpec((tile, F), lambda i: (i, 0)),                 # x batch tile
            pl.BlockSpec((F, H), lambda i: (0, 0)),                    # W1^T (VMEM-resident)
            pl.BlockSpec((1, H), lambda i: (0, 0)),                    # b1
            pl.BlockSpec((1, H), lambda i: (0, 0)),                    # 0.5*(w2[1]-w2[0])
            pl.BlockSpec(memory_space=pltpu.MemorySpace.SMEM),         # 0.5*(b2[1]-b2[0])
        ],
        out_specs=pl.BlockSpec((tile, C), lambda i: (i, 0)),           # row-major (B, 2)
        compiler_params=pltpu.CompilerParams(
            dimension_semantics=("parallel",),
            # Safe on v7x's 64 MiB physical VMEM; raises v5e's 16 MiB scoped default.
            vmem_limit_bytes=48 * 1024 * 1024,
        ),
    )(x, w1t, b1_row, dw_row, db)
    return out


def reference_forward(x, w1, b1, w2, b2):
    # Exact f32 PyTorch semantics: softmax(relu(x @ W1^T + b1) @ W2^T + b2, dim=1)
    h = jnp.maximum(x @ w1.T + b1, 0.0)
    logits = h @ w2.T + b2
    return jax.nn.softmax(logits, axis=1)


if __name__ == "__main__":
    # Small shapes consistent with the module: batch=8, input_size=16, hidden=32, classes=2
    B, F, H, C = 8, 16, 32, 2

    key = jax.random.PRNGKey(0)
    kx, kw1, kb1, kw2, kb2 = jax.random.split(key, 5)

    x = jax.random.normal(kx, (B, F), dtype=jnp.float32)
    # PyTorch-layout parameters: nn.Linear(16, 32) and nn.Linear(32, 2)
    w1 = jax.random.normal(kw1, (H, F), dtype=jnp.float32) * 0.1
    b1 = jax.random.normal(kb1, (H,), dtype=jnp.float32) * 0.1
    w2 = jax.random.normal(kw2, (C, H), dtype=jnp.float32) * 0.1
    b2 = jax.random.normal(kb2, (C,), dtype=jnp.float32) * 0.1

    out = jax.block_until_ready(attack_model_forward(x, w1, b1, w2, b2))
    ref = reference_forward(x, w1, b1, w2, b2)
    assert out.shape == (B, C)
    # bf16 MXU inputs -> compare against the f32 reference with a loose tolerance
    assert jnp.allclose(out, ref, atol=1e-2), "mismatch vs reference (small batch)"
    assert jnp.allclose(jnp.sum(out, axis=1), 1.0, atol=1e-5)

    # Also exercise the production path: multi-tile grid + ragged tail block (no padding copy).
    B2 = 300
    x2 = jax.random.normal(jax.random.PRNGKey(1), (B2, F), dtype=jnp.float32)
    out2 = jax.block_until_ready(attack_model_forward(x2, w1, b1, w2, b2, tile_b=128))
    ref2 = reference_forward(x2, w1, b1, w2, b2)
    assert out2.shape == (B2, C)
    assert jnp.allclose(out2, ref2, atol=1e-2), "mismatch vs reference (ragged tiled batch)"
    assert jnp.allclose(jnp.sum(out2, axis=1), 1.0, atol=1e-5)

    print("KERNEL_OK")
</pallas_src>

<mosaic_0001>
module attributes {stable_mosaic.version = 11 : i64} {
  func.func @attack_kernel(%arg0: i32, %arg1: memref<8x16xf32, #tpu.memory_space<vmem>>, %arg2: memref<16x32xbf16, #tpu.memory_space<vmem>>, %arg3: memref<1x32xf32, #tpu.memory_space<vmem>>, %arg4: memref<1x32xf32, #tpu.memory_space<vmem>>, %arg5: memref<1xf32, #tpu.memory_space<smem>>, %arg6: memref<8x2xf32, #tpu.memory_space<vmem>>) attributes {dimension_semantics = [#tpu.dimension_semantics<parallel>], iteration_bounds = array<i64: 1>, scalar_prefetch = 0 : i64, scratch_operands = 0 : i64, tpu.core_type = #tpu.core_type<tc>, window_params = [{transform_indices = @transform_0, window_bounds = array<i64: 8, 16>}, {pipeline_mode = #tpu.pipeline_mode<synchronous>, transform_indices = @transform_1, window_bounds = array<i64: 16, 32>}, {pipeline_mode = #tpu.pipeline_mode<synchronous>, transform_indices = @transform_2, window_bounds = array<i64: 1, 32>}, {pipeline_mode = #tpu.pipeline_mode<synchronous>, transform_indices = @transform_3, window_bounds = array<i64: 1, 32>}, {transform_indices = @transform_4, window_bounds = array<i64: 1>}, {transform_indices = @transform_5, window_bounds = array<i64: 8, 2>}]} {
    %c0 = arith.constant 0 : index
    %c0_0 = arith.constant 0 : index
    %0 = vector.load %arg1[%c0, %c0_0] : memref<8x16xf32, #tpu.memory_space<vmem>>, vector<8x16xf32>
    %1 = arith.truncf %0 : vector<8x16xf32> to vector<8x16xbf16>
    %c0_1 = arith.constant 0 : index
    %c0_2 = arith.constant 0 : index
    %2 = vector.load %arg2[%c0_1, %c0_2] : memref<16x32xbf16, #tpu.memory_space<vmem>>, vector<16x32xbf16>
    %cst = arith.constant dense<0.000000e+00> : vector<8x32xf32>
    %3 = tpu.matmul %1, %2, %cst {dimension_numbers = #tpu.dot_dimension_numbers<[1], [0], [0], [1], [0, 0, 1, 1], [], []>} : vector<8x16xbf16>, vector<16x32xbf16>, vector<8x32xf32> -> vector<8x32xf32>
    %c0_3 = arith.constant 0 : index
    %c0_4 = arith.constant 0 : index
    %4 = vector.load %arg3[%c0_3, %c0_4] : memref<1x32xf32, #tpu.memory_space<vmem>>, vector<1x32xf32>
    %5 = vector.broadcast %4 : vector<1x32xf32> to vector<8x32xf32>
    %6 = arith.addf %3, %5 : vector<8x32xf32>
    %cst_5 = arith.constant 0.000000e+00 : f32
    %7 = vector.broadcast %cst_5 : f32 to vector<8x32xf32>
    %8 = arith.maximumf %6, %7 : vector<8x32xf32>
    %c0_6 = arith.constant 0 : index
    %c0_7 = arith.constant 0 : index
    %9 = vector.load %arg4[%c0_6, %c0_7] : memref<1x32xf32, #tpu.memory_space<vmem>>, vector<1x32xf32>
    %10 = vector.broadcast %9 : vector<1x32xf32> to vector<8x32xf32>
    %11 = arith.mulf %8, %10 : vector<8x32xf32>
    %cst_8 = arith.constant dense<0.000000e+00> : vector<8xf32>
    %12 = vector.multi_reduction <add>, %11, %cst_8 [1] : vector<8x32xf32> to vector<8xf32>
    %13 = vector.shape_cast %12 : vector<8xf32> to vector<8x1xf32>
    %c0_9 = arith.constant 0 : index
    %14 = memref.load %arg5[%c0_9] : memref<1xf32, #tpu.memory_space<smem>>
    %15 = vector.broadcast %14 : f32 to vector<8x1xf32>
    %16 = arith.addf %13, %15 : vector<8x1xf32>
    %17 = math.tanh %16 : vector<8x1xf32>
    %cst_10 = arith.constant 5.000000e-01 : f32
    %18 = vector.broadcast %cst_10 : f32 to vector<8x1xf32>
    %19 = arith.mulf %18, %17 : vector<8x1xf32>
    %cst_11 = arith.constant 5.000000e-01 : f32
    %20 = vector.broadcast %cst_11 : f32 to vector<8x1xf32>
    %21 = arith.addf %20, %19 : vector<8x1xf32>
    %cst_12 = arith.constant 5.000000e-01 : f32
    %22 = vector.broadcast %cst_12 : f32 to vector<8x1xf32>
    %23 = arith.mulf %22, %17 : vector<8x1xf32>
    %cst_13 = arith.constant 5.000000e-01 : f32
    %24 = vector.broadcast %cst_13 : f32 to vector<8x1xf32>
    %25 = arith.subf %24, %23 : vector<8x1xf32>
    %c0_14 = arith.constant 0 : index
    %c0_15 = arith.constant 0 : index
    %26 = vector.load %arg6[%c0_14, %c0_15] : memref<8x2xf32, #tpu.memory_space<vmem>>, vector<8x1xf32>
    tpu.vector_store %arg6[%c0_14, %c0_15], %25 {strides = array<i32>} : memref<8x2xf32, #tpu.memory_space<vmem>>, vector<8x1xf32>,
    %c0_16 = arith.constant 0 : index
    %c1 = arith.constant 1 : index
    %27 = vector.load %arg6[%c0_16, %c1] : memref<8x2xf32, #tpu.memory_space<vmem>>, vector<8x1xf32>
    tpu.vector_store %arg6[%c0_16, %c1], %21 {strides = array<i32>} : memref<8x2xf32, #tpu.memory_space<vmem>>, vector<8x1xf32>,
    return
  }
  func.func @transform_0(%arg0: i32) -> (i32, i32) {
    %c0_i32 = arith.constant 0 : i32
    %c0_i32_0 = arith.constant 0 : i32
    return %arg0, %c0_i32 : i32, i32
  }
  func.func @transform_1(%arg0: i32) -> (i32, i32) {
    %c0_i32 = arith.constant 0 : i32
    %c0_i32_0 = arith.constant 0 : i32
    %c0_i32_1 = arith.constant 0 : i32
    return %c0_i32, %c0_i32_0 : i32, i32
  }
  func.func @transform_2(%arg0: i32) -> (i32, i32) {
    %c0_i32 = arith.constant 0 : i32
    %c0_i32_0 = arith.constant 0 : i32
    %c0_i32_1 = arith.constant 0 : i32
    return %c0_i32, %c0_i32_0 : i32, i32
  }
  func.func @transform_3(%arg0: i32) -> (i32, i32) {
    %c0_i32 = arith.constant 0 : i32
    %c0_i32_0 = arith.constant 0 : i32
    %c0_i32_1 = arith.constant 0 : i32
    return %c0_i32, %c0_i32_0 : i32, i32
  }
  func.func @transform_4(%arg0: i32) -> i32 {
    %c0_i32 = arith.constant 0 : i32
    %c0_i32_0 = arith.constant 0 : i32
    return %c0_i32 : i32
  }
  func.func @transform_5(%arg0: i32) -> (i32, i32) {
    %c0_i32 = arith.constant 0 : i32
    %c0_i32_0 = arith.constant 0 : i32
    return %arg0, %c0_i32 : i32, i32
  }
}

</mosaic_0001>

<llo_original>
// kernel: tpu_custom_call.1
$region0: #{tpu_custom_call.1}
  #allocation0 [shape = 'u32[]', space=smem, size = 0x4, offset = 0x4, fixed_abs, tag = 'smem constant byte address 0x4 - core index']
  #allocation1 [shape = 'u32[72,128]{1,0:T(1,128)}', space=vmem, size = 0x9000, scoped, tag = 'internal scratch']
  #allocation2 [shape = 'f32[1]{0:T(128)S(6)}', space=smem, size = 0x200, scoped, tag = 'scoped memory for tpu_custom_call.1']
  %s0 = inlined_call_operand.hbm [shape: f32[8,16], index: 0, kind: input, shape index: {}]
  %s1 = inlined_call_operand.hbm [shape: bf16[16,32], index: 1, kind: input, shape index: {}]
  %s2 = inlined_call_operand.vmem [shape: f32[1,32], index: 2, kind: input, shape index: {}]
  %s3 = inlined_call_operand.vmem [shape: f32[1,32], index: 3, kind: input, shape index: {}]
  %s4 = inlined_call_operand.<no memory space> [shape: f32[1], index: 4, kind: input, shape index: {}]
  %s5 = inlined_call_operand.vmem [shape: f32[8,2], index: 5, kind: output, shape index: {}]
  %s6 = sld [smem:[#allocation0]]
  $region38: #{tpu_custom_call.1} parent=0
    _
  %s8 = ssub.s32 1, %s6
  %s9 = scalar_select 0, %s8, %s6
  %10 = sst [smem:[#allocation2]] %s4
  $region1: #{tpu_custom_call.1} parent=0
    #allocation3 [shape = 'u8[4096]{0}', space=vmem, size = 0x1000, scoped, tag = 'input window, operand 0, single buffered']
    #allocation4 [shape = 's32[1]{0}', space=sflag, size = 0x4, scoped, tag = 'scoped memory for tpu_custom_call.1']
    #allocation5 [shape = 'u8[4096]{0}', space=vmem, size = 0x1000, scoped, tag = 'input window, operand 1, single buffered']
    #allocation6 [shape = 's32[1]{0}', space=sflag, size = 0x4, scoped, tag = 'scoped memory for tpu_custom_call.1']
    %11 = vsyncpa [#allocation4], 0
    %12 = vsyncpa [#allocation6], 0
    // Predicated region
    $region2: #{tpu_custom_call.1} parent=1 // pred_check
      _
    $region3: #{tpu_custom_call.1} parent=1 // pred_check_branch
      %14 = sbr.rel (0) target = $region5
    $region4: #{tpu_custom_call.1} parent=1 // pred_region
      %16 = vsyncadd [#allocation4], 0
      %s18 = sshll.u32 %s0, 4
      %s19 = int_to_ptr.hbm [resolvable:$true] %s18
      %s20 = sshll.u32 [#allocation3], 4
      %s21 = int_to_ptr.vmem [resolvable:$true] %s20
      %23 = dma.hbm_to_vmem [thread:$0]  %s19, 128, %s21, [#allocation4]
    $region5: #{tpu_custom_call.1} parent=1 // pred_fallthru
      _
    // Predicated region
    $region6: #{tpu_custom_call.1} parent=1 // pred_check
      _
    $region7: #{tpu_custom_call.1} parent=1 // pred_check_branch
      %25 = sbr.rel (0) target = $region9
    $region8: #{tpu_custom_call.1} parent=1 // pred_region
      %27 = vsyncadd [#allocation6], 0
      %s28 = sshll.u32 %s1, 4
      %s29 = int_to_ptr.hbm [resolvable:$true] %s28
      %s30 = sshll.u32 [#allocation5], 4
      %s31 = int_to_ptr.vmem [resolvable:$true] %s30
      %36 = dma.hbm_to_vmem [thread:$0]  %s29, 128, %s31, [#allocation6], 64, 64, 4
    $region9: #{tpu_custom_call.1} parent=1 // pred_fallthru
      _
    // Predicated region
    $region10: #{tpu_custom_call.1} parent=1 // pred_check
      _
    $region11: #{tpu_custom_call.1} parent=1 // pred_check_branch
      %38 = sbr.rel (0) target = $region13
    $region12: #{tpu_custom_call.1} parent=1 // pred_region
      _
    $region13: #{tpu_custom_call.1} parent=1 // pred_fallthru
      _
    // Predicated region
    $region14: #{tpu_custom_call.1} parent=1 // pred_check
      _
    $region15: #{tpu_custom_call.1} parent=1 // pred_check_branch
      %40 = sbr.rel (0) target = $region17
    $region16: #{tpu_custom_call.1} parent=1 // pred_region
      _
    $region17: #{tpu_custom_call.1} parent=1 // pred_fallthru
      _
    // Predicated region
    $region18: #{tpu_custom_call.1} parent=1 // pred_check
      _
    $region19: #{tpu_custom_call.1} parent=1 // pred_check_branch
      %42 = sbr.rel (0) target = $region21
    $region20: #{tpu_custom_call.1} parent=1 // pred_region
      _
    $region21: #{tpu_custom_call.1} parent=1 // pred_fallthru
      _
    // Predicated region
    $region22: #{tpu_custom_call.1} parent=1 // pred_check
      _
    $region23: #{tpu_custom_call.1} parent=1 // pred_check_branch
      %44 = sbr.rel (0) target = $region25
    $region24: #{tpu_custom_call.1} parent=1 // pred_region
      %46 = dma.done [#allocation4], 128
    $region25: #{tpu_custom_call.1} parent=1 // pred_fallthru
      _
    // Predicated region
    $region26: #{tpu_custom_call.1} parent=1 // pred_check
      _
    $region27: #{tpu_custom_call.1} parent=1 // pred_check_branch
      %48 = sbr.rel (0) target = $region29
    $region28: #{tpu_custom_call.1} parent=1 // pred_region
      %50 = dma.done [#allocation6], 128
    $region29: #{tpu_custom_call.1} parent=1 // pred_fallthru
      _
    %v52 = vld [vmem:[#allocation3] sm:$0xff]
    %v53 = vpack.c.bf16 %v52, %v52
    %v54 = vld [vmem:[#allocation5] sm:$0xf]
    %v55 = vld [vmem:[#allocation5 + $0x4] sm:$0xf]
    %v56 = vld [vmem:[%s2] sm:$0x1]
    %v58 = vperm.slane %v56, 0
    %v62 = vunpack.c.l.b16 %v54
    %v63 = vunpack.c.l.b16 %v55
    %v64 = vpack.c.b16 %v63, %v62
    %vm66 = vcmask 130048
    %v68 = vsel %vm66, %v53, 0
    %70 = vmatpush.bf16.msra.mxu0 0
    %71 = vmatpush.bf16.msra.mxu0 0
    %72 = vmatpush.bf16.msra.mxu0 0
    %73 = vmatpush.bf16.msra.mxu0 0
    %74 = vmatpush.bf16.msra.mxu0 0
    %75 = vmatpush.bf16.msra.mxu0 0
    %76 = vmatpush.bf16.msra.mxu0 0
    %77 = vmatpush.bf16.msra.mxu0 %v64
    %78 = vmatmul.bf16.gmra.mxu0 %v68
    %v79 = vpop.f32.mrf.mxu0
    %v80 = vadd.f32 %v58, %v79
    %v81 = vpop.f32.mrf.mxu0
    %82 = vdwg.mxu0
    %v83 = vmax.f32 %v80, 0.0
    %v84 = vld [vmem:[%s3] sm:$0x1]
    %v86 = vperm.slane %v84, 0
    %v88 = vmul.f32 %v83, %v86
    %vm89 = vcmask 261120
    %v90 = vsel %vm89, %v88, 0.0
    %91 = vadd.xlane.f32.xlu0 %v90
    %v92 = vpop.xlane.xlu0 %91
    %s93 = sld [smem:[#allocation2]]
    %v94 = vstv %s93
    %v95 = vadd.f32 %v92, %v94
    %v96 = vtanh.pop %v95
    %v97 = vmul.f32 %v96, 0.5
    %v98 = vadd.f32 %v97, 0.5
    %v99 = vsub.f32 0.5, %v97
    %vm100 = vcmask 7168
    %101 = vst.msk [vmem:[%s5] sm:$0xff] %vm100, %v99
    %vm102 = vcmask 15368
    %103 = vst.msk [vmem:[%s5] sm:$0xff] %vm102, %v98
    // Predicated region
    $region30: #{tpu_custom_call.1} parent=1 // pred_check
      _
    $region31: #{tpu_custom_call.1} parent=1 // pred_check_branch
      %105 = sbr.rel (0) target = $region33
    $region32: #{tpu_custom_call.1} parent=1 // pred_region
      _
    $region33: #{tpu_custom_call.1} parent=1 // pred_fallthru
      _
    // Predicated region
    $region34: #{tpu_custom_call.1} parent=1 // pred_check
      _
    $region35: #{tpu_custom_call.1} parent=1 // pred_check_branch
      %107 = sbr.rel (0) target = $region37
    $region36: #{tpu_custom_call.1} parent=1 // pred_region
      _
    $region37: #{tpu_custom_call.1} parent=1 // pred_fallthru
      _
    %108 = vsyncpa [#allocation4], 1
    %109 = vsyncpa [#allocation6], 1

</llo_original>
